<compile_context>
chip_gen: v7x
topology: tpu7x:2x2x1
jax: 0.10.0
libtpu: 0.0.40
codegen_flags: <defaults>
</compile_context>

<pallas_src>
import functools

import jax
import jax.numpy as jnp
from jax.experimental import pallas as pl
from jax.experimental.pallas import tpu as pltpu


# ---------------------------------------------------------------------------
# Kernels
# ---------------------------------------------------------------------------

def _bce_flat_kernel(pred_ref, gold_ref, out_ref, *, tr):
    """Flattened-channel fast path.

    pred_ref / gold_ref : (1, TR, 128) native-dtype tiles of the (B, C*R, 128)
                          view; channel 0 is skipped by the index_map offset.
    out_ref             : (1, 1, 8, 128) f32 per-(sublane, lane) partial sums.
    """
    x = pred_ref[...].astype(jnp.float32)
    y = gold_ref[...].astype(jnp.float32)
    # Numerically-stable BCEWithLogits (matches PyTorch):
    #   loss = max(x, 0) - x*y + log(1 + exp(-|x|))
    # TODO(synk): optional bf16 exp/log1p variant for v6e/v7x (bf16 EUP) once
    # profiling shows the EUP slot saturating; keep f32 on v5e.
    bce = jnp.maximum(x, 0.0) - x * y + jnp.log1p(jnp.exp(-jnp.abs(x)))
    # Group rows by 8 and sum over the groups: pure elementwise vreg adds
    # (no cross-sublane XLU reduce in the hot loop).
    part = jnp.sum(bce.reshape(tr // 8, 8, 128), axis=0)   # (8, 128)
    out_ref[...] = part[None, None]


def _bce_small_r_kernel(pred_ref, gold_ref, out_ref):
    """Whole-channel-tile path for R = H*W/128 not a multiple of 8.

    pred_ref / gold_ref : (1, 1, R, 128) native-dtype tiles (channel c+1).
    out_ref             : (1, 1, 1, 128) f32 per-lane partial sums.
    """
    x = pred_ref[...].astype(jnp.float32)
    y = gold_ref[...].astype(jnp.float32)
    bce = jnp.maximum(x, 0.0) - x * y + jnp.log1p(jnp.exp(-jnp.abs(x)))
    out_ref[...] = jnp.sum(bce, axis=2, keepdims=True)      # (1, 1, 1, 128)


# ---------------------------------------------------------------------------
# Tiling / VMEM budgets
# ---------------------------------------------------------------------------

def _budgets():
    """(per-input tile-byte budget, vmem_limit_bytes), generation-aware."""
    try:
        cap = int(pltpu.get_tpu_info().vmem_capacity_bytes)
    except Exception:
        cap = 64 * 1024 * 1024
    if cap >= 96 * 1024 * 1024:
        # v5e / v6e: 128 MiB physical VMEM — 2 in x 2 buf x 8 MiB = 32 MiB.
        return 8 * 1024 * 1024, 64 * 1024 * 1024
    # v7x (64 MiB per TensorCore) or unknown: stay conservative.
    return 4 * 1024 * 1024, 48 * 1024 * 1024


def _pick_tile_rows(R, B, Cm1, tile_budget, itemsize):
    """Largest TR that (a) is a multiple of 8, (b) divides R (so the channel-0
    skip lands on a block boundary), (c) keeps one input tile <= tile_budget,
    and (d) still yields >= 2 grid blocks when possible (v7x has 2 cores)."""
    max_rows = max(8, tile_budget // (128 * itemsize))
    cands = [d for d in range(8, R + 1, 8) if R % d == 0 and d <= max_rows]
    if not cands:
        cands = [8]
    for tr in sorted(cands, reverse=True):
        if B * ((Cm1 * R) // tr) >= 2:
            return tr
    return min(cands)


# ---------------------------------------------------------------------------
# Core
# ---------------------------------------------------------------------------

def _jax_fallback(pred, gold, w, inv_denom):
    # TODO(synk): add a lane-padded Pallas path for H*W not divisible by 128.
    x = pred[:, 1:].astype(jnp.float32)
    y = gold[:, 1:].astype(jnp.float32)
    bce = jnp.maximum(x, 0.0) - x * y + jnp.log1p(jnp.exp(-jnp.abs(x)))
    per_b = jnp.sum(bce, axis=(1, 2, 3))
    return jnp.dot(per_b, w) * jnp.float32(inv_denom)


def _soft_sigmoid_core(pred, gold, w, inv_denom):
    """pred/gold: (B, C, H, W) native dtype; w: (B,) f32; returns scalar f32."""
    B, C, H, W = pred.shape
    assert gold.shape == pred.shape
    Cm1 = C - 1
    HW = H * W
    if Cm1 <= 0:
        return jnp.float32(0.0)
    if HW % 128 != 0:
        return _jax_fallback(pred, gold, w, inv_denom)

    R = HW // 128
    itemsize = max(jnp.dtype(pred.dtype).itemsize, jnp.dtype(gold.dtype).itemsize)
    tile_budget, vmem_limit = _budgets()

    if R % 8 == 0:
        # --- fast path: flattened channel axis, no reduction grid axis -----
        TR = _pick_tile_rows(R, B, Cm1, tile_budget, itemsize)
        NT = (Cm1 * R) // TR
        off = R // TR                         # channel-0 skip, in block units
        p3 = pred.reshape(B, C * R, 128)      # free contiguous reshapes
        g3 = gold.reshape(B, C * R, 128)

        partials = pl.pallas_call(
            functools.partial(_bce_flat_kernel, tr=TR),
            out_shape=jax.ShapeDtypeStruct((B, NT, 8, 128), jnp.float32),
            grid=(B, NT),
            in_specs=[
                pl.BlockSpec((1, TR, 128), lambda b, t: (b, off + t, 0)),
                pl.BlockSpec((1, TR, 128), lambda b, t: (b, off + t, 0)),
            ],
            out_specs=pl.BlockSpec((1, 1, 8, 128), lambda b, t: (b, t, 0, 0)),
            compiler_params=pltpu.CompilerParams(
                dimension_semantics=("parallel", "parallel"),
                vmem_limit_bytes=vmem_limit),
        )(p3, g3)
    else:
        # --- odd-R path: whole-channel tiles (full-dim block is legal) -----
        tile_bytes = R * 128 * itemsize
        if 2 * 2 * tile_bytes + (4 << 20) > vmem_limit:
            # Never emit a tile set that can't fit the VMEM limit.
            return _jax_fallback(pred, gold, w, inv_denom)
        p4 = pred.reshape(B, C, R, 128)
        g4 = gold.reshape(B, C, R, 128)

        partials = pl.pallas_call(
            _bce_small_r_kernel,
            out_shape=jax.ShapeDtypeStruct((B, Cm1, 1, 128), jnp.float32),
            grid=(B, Cm1),
            in_specs=[
                pl.BlockSpec((1, 1, R, 128), lambda b, c: (b, c + 1, 0, 0)),
                pl.BlockSpec((1, 1, R, 128), lambda b, c: (b, c + 1, 0, 0)),
            ],
            out_specs=pl.BlockSpec((1, 1, 1, 128), lambda b, c: (b, c, 0, 0)),
            compiler_params=pltpu.CompilerParams(
                dimension_semantics=("parallel", "parallel"),
                vmem_limit_bytes=vmem_limit),
        )(p4, g4)

    # Tiny JAX epilogue: finish the reduction, apply the per-batch weight and
    # the 1/(B*H*W) mean.
    per_batch = jnp.sum(partials, axis=tuple(range(1, partials.ndim)))   # (B,)
    return jnp.dot(per_batch, w) * jnp.float32(inv_denom)


# ---------------------------------------------------------------------------
# Module-equivalent wrappers
# ---------------------------------------------------------------------------

def soft_sigmoid_loss_single(pred, gold, weight=None):
    """Equivalent of SoftSigmoidLoss.forward_single. pred/gold: (B, C, H, W)."""
    B, C, H, W = pred.shape
    if weight is None:
        w = jnp.ones((B,), jnp.float32)
    else:
        w = weight.astype(jnp.float32).reshape(B)
    return _soft_sigmoid_core(pred, gold, w, inv_denom=1.0 / (B * H * W))


# Fuse same-shaped levels into one pallas_call only when the stacked copy is
# cheap (launch-overhead-dominated regime); large levels run one call each.
_FUSE_BYTES_LIMIT = 8 * 1024 * 1024


def soft_sigmoid_loss(pred_list, gold_list, weight=None):
    """Equivalent of SoftSigmoidLoss.forward with list inputs."""
    n = len(pred_list)
    same_shape = (
        all(p.shape == pred_list[0].shape and p.dtype == pred_list[0].dtype
            for p in pred_list)
        and all(g.shape == pred_list[0].shape for g in gold_list)
    )
    total_bytes = sum(int(p.size) * jnp.dtype(p.dtype).itemsize for p in pred_list)

    if n > 1 and same_shape and total_bytes <= _FUSE_BYTES_LIMIT:
        B, C, H, W = pred_list[0].shape
        pred = jnp.concatenate(pred_list, axis=0)     # (n*B, C, H, W) — small, cheap
        gold = jnp.concatenate(gold_list, axis=0)
        if weight is None:
            w = jnp.ones((n * B,), jnp.float32)
        else:
            w = jnp.tile(weight.astype(jnp.float32).reshape(B), n)
        # mean over levels of per-level means == weighted sum / (n*B*H*W)
        return _soft_sigmoid_core(pred, gold, w, inv_denom=1.0 / (n * B * H * W))

    losses = [
        soft_sigmoid_loss_single(p, g, weight)
        for p, g in zip(pred_list, gold_list)
    ]
    return sum(losses) / n


# ---------------------------------------------------------------------------
# Reference + smoke test
# ---------------------------------------------------------------------------

def _reference_loss(pred_list, gold_list, weight=None):
    """Pure-JAX reference mirroring the PyTorch module."""
    def single(pred, gold):
        x = pred[:, 1:].astype(jnp.float32)
        y = gold[:, 1:].astype(jnp.float32)
        bce = jnp.maximum(x, 0.0) - x * y + jnp.log1p(jnp.exp(-jnp.abs(x)))
        loss = jnp.sum(bce, axis=1)  # (B, H, W)
        if weight is not None:
            loss = loss * weight[:, None, None]
        return jnp.mean(loss)
    losses = [single(p, g) for p, g in zip(pred_list, gold_list)]
    return sum(losses) / len(losses)


if __name__ == "__main__":
    key = jax.random.PRNGKey(0)
    n_levels = 2  # forward() expects a list of predictions (multi-scale heads)

    # --- main fast path: H*W = 1024 -> R = 8 (flattened kernel) ------------
    B, C, H, W = 2, 4, 32, 32
    keys = jax.random.split(key, 2 * n_levels + 1)
    pred_list = [
        jax.random.normal(keys[i], (B, C, H, W), dtype=jnp.float32)
        for i in range(n_levels)
    ]
    gold_list = [
        jax.random.uniform(keys[n_levels + i], (B, C, H, W), dtype=jnp.float32)
        for i in range(n_levels)
    ]
    weight = jax.random.uniform(keys[-1], (B,), dtype=jnp.float32) + 0.5

    # list (multi-scale) path — fused single pallas_call for same-shaped levels
    loss = jax.block_until_ready(
        soft_sigmoid_loss(pred_list, gold_list, weight=weight))
    ref = _reference_loss(pred_list, gold_list, weight=weight)
    assert jnp.allclose(loss, ref, rtol=1e-5, atol=1e-5), (loss, ref)

    # single-tensor path
    loss1 = jax.block_until_ready(
        soft_sigmoid_loss_single(pred_list[0], gold_list[0], weight=weight))
    ref1 = _reference_loss([pred_list[0]], [gold_list[0]], weight=weight)
    assert jnp.allclose(loss1, ref1, rtol=1e-5, atol=1e-5), (loss1, ref1)

    # --- small-R path: H*W = 256 -> R = 2 (whole-channel tiles) ------------
    kp, kg = jax.random.split(keys[0])
    pred_s = jax.random.normal(kp, (2, 4, 16, 16), dtype=jnp.float32)
    gold_s = jax.random.uniform(kg, (2, 4, 16, 16), dtype=jnp.float32)
    loss_s = jax.block_until_ready(
        soft_sigmoid_loss_single(pred_s, gold_s, weight=weight))
    ref_s = _reference_loss([pred_s], [gold_s], weight=weight)
    assert jnp.allclose(loss_s, ref_s, rtol=1e-5, atol=1e-5), (loss_s, ref_s)

    print("KERNEL_OK")
</pallas_src>

<mosaic_0001>
module attributes {stable_mosaic.version = 11 : i64} {
  func.func @_bce_flat_kernel(%arg0: i32, %arg1: i32, %arg2: memref<1x8x128xf32, #tpu.memory_space<vmem>>, %arg3: memref<1x8x128xf32, #tpu.memory_space<vmem>>, %arg4: memref<1x1x8x128xf32, #tpu.memory_space<vmem>>) attributes {dimension_semantics = [#tpu.dimension_semantics<parallel>, #tpu.dimension_semantics<parallel>], iteration_bounds = array<i64: 4, 3>, scalar_prefetch = 0 : i64, scratch_operands = 0 : i64, tpu.core_type = #tpu.core_type<tc>, window_params = [{transform_indices = @transform_0, window_bounds = array<i64: 1, 8, 128>}, {transform_indices = @transform_1, window_bounds = array<i64: 1, 8, 128>}, {transform_indices = @transform_2, window_bounds = array<i64: 1, 1, 8, 128>}]} {
    %c0 = arith.constant 0 : index
    %c0_0 = arith.constant 0 : index
    %c0_1 = arith.constant 0 : index
    %0 = vector.load %arg2[%c0, %c0_0, %c0_1] : memref<1x8x128xf32, #tpu.memory_space<vmem>>, vector<1x8x128xf32>
    %c0_2 = arith.constant 0 : index
    %c0_3 = arith.constant 0 : index
    %c0_4 = arith.constant 0 : index
    %1 = vector.load %arg3[%c0_2, %c0_3, %c0_4] : memref<1x8x128xf32, #tpu.memory_space<vmem>>, vector<1x8x128xf32>
    %cst = arith.constant 0.000000e+00 : f32
    %2 = vector.broadcast %cst : f32 to vector<1x8x128xf32>
    %3 = arith.maximumf %0, %2 : vector<1x8x128xf32>
    %4 = arith.mulf %0, %1 : vector<1x8x128xf32>
    %5 = arith.subf %3, %4 : vector<1x8x128xf32>
    %6 = math.absf %0 : vector<1x8x128xf32>
    %cst_5 = arith.constant 0.000000e+00 : f32
    %7 = vector.broadcast %cst_5 : f32 to vector<1x8x128xf32>
    %8 = arith.subf %7, %6 : vector<1x8x128xf32>
    %9 = math.exp %8 : vector<1x8x128xf32>
    %10 = math.log1p %9 : vector<1x8x128xf32>
    %11 = arith.addf %5, %10 : vector<1x8x128xf32>
    %cst_6 = arith.constant dense<0.000000e+00> : vector<8x128xf32>
    %12 = vector.multi_reduction <add>, %11, %cst_6 [0] : vector<1x8x128xf32> to vector<8x128xf32>
    %13 = vector.shape_cast %12 : vector<8x128xf32> to vector<1x1x8x128xf32>
    %c0_7 = arith.constant 0 : index
    %c0_8 = arith.constant 0 : index
    %c0_9 = arith.constant 0 : index
    %c0_10 = arith.constant 0 : index
    %14 = vector.load %arg4[%c0_7, %c0_8, %c0_9, %c0_10] : memref<1x1x8x128xf32, #tpu.memory_space<vmem>>, vector<1x1x8x128xf32>
    tpu.vector_store %arg4[%c0_7, %c0_8, %c0_9, %c0_10], %13 {strides = array<i32>} : memref<1x1x8x128xf32, #tpu.memory_space<vmem>>, vector<1x1x8x128xf32>,
    return
  }
  func.func @transform_0(%arg0: i32, %arg1: i32) -> (i32, i32, i32) {
    %c1_i32 = arith.constant 1 : i32
    %0 = arith.addi %c1_i32, %arg1 : i32
    %c0_i32 = arith.constant 0 : i32
    %c0_i32_0 = arith.constant 0 : i32
    return %arg0, %0, %c0_i32 : i32, i32, i32
  }
  func.func @transform_1(%arg0: i32, %arg1: i32) -> (i32, i32, i32) {
    %c1_i32 = arith.constant 1 : i32
    %0 = arith.addi %c1_i32, %arg1 : i32
    %c0_i32 = arith.constant 0 : i32
    %c0_i32_0 = arith.constant 0 : i32
    return %arg0, %0, %c0_i32 : i32, i32, i32
  }
  func.func @transform_2(%arg0: i32, %arg1: i32) -> (i32, i32, i32, i32) {
    %c0_i32 = arith.constant 0 : i32
    %c0_i32_0 = arith.constant 0 : i32
    %c0_i32_1 = arith.constant 0 : i32
    return %arg0, %arg1, %c0_i32, %c0_i32_0 : i32, i32, i32, i32
  }
}

</mosaic_0001>

<llo_original>
// kernel: tpu_custom_call.1
$region0: #{tpu_custom_call.1}
  #allocation0 [shape = 'u32[]', space=smem, size = 0x4, offset = 0x4, fixed_abs, tag = 'smem constant byte address 0x4 - core index']
  #allocation1 [shape = 'u32[144,128]{1,0:T(1,128)}', space=vmem, size = 0x12000, scoped, tag = 'internal scratch']
  %s0 = inlined_call_operand.hbm [shape: f32[4,32,128], index: 0, kind: input, shape index: {}]
  %s1 = inlined_call_operand.hbm [shape: f32[4,32,128], index: 1, kind: input, shape index: {}]
  %s2 = inlined_call_operand.hbm [shape: f32[4,3,8,128], index: 2, kind: output, shape index: {}]
  %s3 = sld [smem:[#allocation0]]
  $region49: #{tpu_custom_call.1} parent=0
    _
  %s5 = ssub.s32 1, %s3
  %s6 = scalar_select 0, %s5, %s3
  $region1: #{tpu_custom_call.1} parent=0
    #allocation2 [shape = 'u8[8192]{0}', space=vmem, size = 0x2000, scoped, tag = 'input window, operand 0']
    #allocation3 [shape = 's32[2]{0}', space=sflag, size = 0x8, scoped, tag = 'scoped memory for tpu_custom_call.1']
    #allocation4 [shape = 's32[2]{0}', space=sflag, size = 0x8, scoped, tag = 'scoped memory for tpu_custom_call.1']
    #allocation5 [shape = 'u8[8192]{0}', space=vmem, size = 0x2000, scoped, tag = 'input window, operand 1']
    #allocation6 [shape = 's32[2]{0}', space=sflag, size = 0x8, scoped, tag = 'scoped memory for tpu_custom_call.1']
    #allocation7 [shape = 'u8[8192]{0}', space=vmem, size = 0x2000, scoped, tag = 'output window, operand 0']
    %7 = vsyncpa [#allocation3], 0
    %s8 = scalar_lea.sflag [#allocation3], 1
    %9 = vsyncpa %s8, 0
    %10 = vsyncpa [#allocation6], 0
    %s11 = scalar_lea.sflag [#allocation6], 1
    %12 = vsyncpa %s11, 0
    %13 = vsyncpa [#allocation4], 0
    %s14 = scalar_lea.sflag [#allocation4], 1
    %15 = vsyncpa %s14, 0
    loop: start=0, step=1, limit=14
    $region2: #{tpu_custom_call.1} parent=1 // loop_pre_header
      _
    $region3: #{tpu_custom_call.1} parent=1 // loop_header
      %s17 = sphi 0, %s21
      %p18 = scmp.ge.s32.totalorder %s17, 14
      %s24 = sphi 0, %s36
      %s25 = sphi 0, %s32
      %s26 = sphi 0, %s24
      %s27 = sphi 0, %s25
      %s28 = sphi 0, %s26
      %s29 = sphi 0, %s27
      %s43 = sphi 0, %s45
      %s46 = sphi 0, %s43
      %s47 = sphi 0, %s46
      %s63 = sphi 0, %s47
      %s73 = sphi 0, %s75
      %s76 = sphi 0, %s73
      %s77 = sphi 0, %s76
      %s93 = sphi 0, %s77
      %s101 = sphi 0, %s103
      %s104 = sphi 0, %s101
      %s105 = sphi 0, %s104
      %s121 = sphi 0, %s105
    $region4: #{tpu_custom_call.1} parent=1 // loop_header_branch
      %20 = sbr.rel (%p18) target = $region8
    $region5: #{tpu_custom_call.1} parent=1 // loop_body
      %s22 = ssub.s32 %s17, 1
      %s23 = ssub.s32 %s17, 2
      %s30 = sadd.s32 1, %s25
      %p31 = scmp.ge.s32.totalorder %s30, 3
      %s32 = scalar_select %p31, 0, %s30
      %s33 = sadd.s32 1, %s24
      %s34 = scalar_select %p31, %s33, %s24
      %p35 = scmp.ge.s32.totalorder %s34, 4
      %s36 = scalar_select %p35, 0, %s34
      %s37 = sadd.s32 %s25, 1
      %s38 = sadd.s32 %s32, 1
      %s39 = ssub.s32 %s24, %s36
      %s40 = ssub.s32 %s37, %s38
      %s41 = sor.u32 %s39, %s40
      %p42 = scmp.eq.s32.totalorder %s41, 0
      %s44 = sadd.s32 %s43, 1
      %s45 = scalar_select %p42, %s43, %s44
      %p48 = pneg %p42
      %p49 = scmp.eq.s32.totalorder %s17, 11
      %p50 = por %p48, %p49
      %p51 = scmp.ne.s32.totalorder %s43, %s46
      %p52 = scmp.eq.s32.totalorder %s17, 0
      %p53 = por %p51, %p52
      %p54 = scmp.ne.s32.totalorder %s43, %s46
      %p55 = scmp.eq.s32.totalorder %s22, 11
      %p56 = por %p54, %p55
      %p57 = scmp.ne.s32.totalorder %s46, %s47
      %p58 = scmp.eq.s32.totalorder %s22, 0
      %p59 = por %p57, %p58
      %p60 = scmp.ne.s32.totalorder %s46, %s47
      %p61 = scmp.eq.s32.totalorder %s23, 11
      %p62 = por %p60, %p61
      %p64 = scmp.ne.s32.totalorder %s47, %s63
      %p65 = scmp.eq.s32.totalorder %s23, 0
      %p66 = por %p64, %p65
      %s67 = sadd.s32 %s25, 1
      %s68 = sadd.s32 %s32, 1
      %s69 = ssub.s32 %s24, %s36
      %s70 = ssub.s32 %s67, %s68
      %s71 = sor.u32 %s69, %s70
      %p72 = scmp.eq.s32.totalorder %s71, 0
      %s74 = sadd.s32 %s73, 1
      %s75 = scalar_select %p72, %s73, %s74
      %p78 = pneg %p72
      %p79 = scmp.eq.s32.totalorder %s17, 11
      %p80 = por %p78, %p79
      %p81 = scmp.ne.s32.totalorder %s73, %s76
      %p82 = scmp.eq.s32.totalorder %s17, 0
      %p83 = por %p81, %p82
      %p84 = scmp.ne.s32.totalorder %s73, %s76
      %p85 = scmp.eq.s32.totalorder %s22, 11
      %p86 = por %p84, %p85
      %p87 = scmp.ne.s32.totalorder %s76, %s77
      %p88 = scmp.eq.s32.totalorder %s22, 0
      %p89 = por %p87, %p88
      %p90 = scmp.ne.s32.totalorder %s76, %s77
      %p91 = scmp.eq.s32.totalorder %s23, 11
      %p92 = por %p90, %p91
      %p94 = scmp.ne.s32.totalorder %s77, %s93
      %p95 = scmp.eq.s32.totalorder %s23, 0
      %p96 = por %p94, %p95
      %s97 = ssub.s32 %s24, %s36
      %s98 = ssub.s32 %s25, %s32
      %s99 = sor.u32 %s97, %s98
      %p100 = scmp.eq.s32.totalorder %s99, 0
      %s102 = sadd.s32 %s101, 1
      %s103 = scalar_select %p100, %s101, %s102
      %p106 = pneg %p100
      %p107 = scmp.eq.s32.totalorder %s17, 11
      %p108 = por %p106, %p107
      %p109 = scmp.ne.s32.totalorder %s101, %s104
      %p110 = scmp.eq.s32.totalorder %s17, 0
      %p111 = por %p109, %p110
      %p112 = scmp.ne.s32.totalorder %s101, %s104
      %p113 = scmp.eq.s32.totalorder %s22, 11
      %p114 = por %p112, %p113
      %p115 = scmp.ne.s32.totalorder %s104, %s105
      %p116 = scmp.eq.s32.totalorder %s22, 0
      %p117 = por %p115, %p116
      %p118 = scmp.ne.s32.totalorder %s104, %s105
      %p119 = scmp.eq.s32.totalorder %s23, 11
      %p120 = por %p118, %p119
      %p122 = scmp.ne.s32.totalorder %s105, %s121
      %p123 = scmp.eq.s32.totalorder %s23, 0
      %p124 = por %p122, %p123
      %p125 = scmp.le.s32.totalorder 1, %s17
      %p126 = scmp.lt.s32.totalorder %s17, 13
      %p127 = pnand %p125, %p126
      %p128 = pneg %p127
      // Predicated region
      $region9: #{tpu_custom_call.1} parent=5 // pred_check
        _
      $region10: #{tpu_custom_call.1} parent=5 // pred_check_branch
        %130 = sbr.rel (%p127) target = $region12
      $region11: #{tpu_custom_call.1} parent=5 // pred_region
        %s131 = ssub.s32 %s17, 1
      $region12: #{tpu_custom_call.1} parent=5 // pred_fallthru
        _
      %p132 = scmp.lt.s32.totalorder %s17, 12
      // Predicated region
      $region13: #{tpu_custom_call.1} parent=5 // pred_check
        %p133 = pneg %p132
      $region14: #{tpu_custom_call.1} parent=5 // pred_check_branch
        %135 = sbr.rel (%p133) target = $region16
      $region15: #{tpu_custom_call.1} parent=5 // pred_region
        // Predicated region
        $region17: #{tpu_custom_call.1} parent=15 // pred_check
          %p136 = pneg %p53
        $region18: #{tpu_custom_call.1} parent=15 // pred_check_branch
          %138 = sbr.rel (%p136) target = $region20
        $region19: #{tpu_custom_call.1} parent=15 // pred_region
          %s139 = sand.u32 %s43, 1
          %s140 = scalar_lea.sflag [#allocation3], %s139
          %s141 = sand.u32 %s43, 1
          %s142 = smul.addr %s141, 8
          %s143 = scalar_lea.vmem [#allocation2], %s142
          %s144 = sadd.s32 %s25, 1
          %s146 = ssub.s32 128, 128
          %147 = vsyncadd %s140, %s146
          %s148 = smul.addr %s24, 4
          %s149 = sadd.s32 %s144, %s148
          %s150 = smul.addr %s149, 128
          %s151 = scalar_lea.hbm %s0, %s150
          %s153 = sshll.u32 %s143, 4
          %s154 = int_to_ptr.vmem [resolvable:$true] %s153
          %156 = dma.hbm_to_vmem [thread:$0]  %s151, 128, %s154, %s140
        $region20: #{tpu_custom_call.1} parent=15 // pred_fallthru
          _
        // Predicated region
        $region21: #{tpu_custom_call.1} parent=15 // pred_check
          %p157 = pneg %p83
        $region22: #{tpu_custom_call.1} parent=15 // pred_check_branch
          %159 = sbr.rel (%p157) target = $region24
        $region23: #{tpu_custom_call.1} parent=15 // pred_region
          %s160 = sand.u32 %s73, 1
          %s161 = scalar_lea.sflag [#allocation6], %s160
          %s162 = sand.u32 %s73, 1
          %s163 = smul.addr %s162, 8
          %s164 = scalar_lea.vmem [#allocation5], %s163
          %s165 = sadd.s32 %s25, 1
          %s167 = ssub.s32 128, 128
          %168 = vsyncadd %s161, %s167
          %s169 = smul.addr %s24, 4
          %s170 = sadd.s32 %s165, %s169
          %s171 = smul.addr %s170, 128
          %s172 = scalar_lea.hbm %s1, %s171
          %s174 = sshll.u32 %s164, 4
          %s175 = int_to_ptr.vmem [resolvable:$true] %s174
          %177 = dma.hbm_to_vmem [thread:$0]  %s172, 128, %s175, %s161
        $region24: #{tpu_custom_call.1} parent=15 // pred_fallthru
          _
      $region16: #{tpu_custom_call.1} parent=5 // pred_fallthru
        _
      %p178 = scmp.le.s32.totalorder 1, %s17
      %p179 = scmp.lt.s32.totalorder %s17, 13
      %p180 = pnand %p178, %p179
      %p181 = pneg %p180
      // Predicated region
      $region25: #{tpu_custom_call.1} parent=5 // pred_check
        _
      $region26: #{tpu_custom_call.1} parent=5 // pred_check_branch
        %183 = sbr.rel (%p180) target = $region28
      $region27: #{tpu_custom_call.1} parent=5 // pred_region
        %s184 = ssub.s32 %s17, 1
        %s185 = sand.u32 %s46, 1
        %s186 = scalar_lea.sflag [#allocation3], %s185
        %s187 = sand.u32 %s46, 1
        %s188 = smul.addr %s187, 8
        %s189 = scalar_lea.vmem [#allocation2], %s188
        // Predicated region
        $region29: #{tpu_custom_call.1} parent=27 // pred_check
          %p190 = pneg %p59
        $region30: #{tpu_custom_call.1} parent=27 // pred_check_branch
          %192 = sbr.rel (%p190) target = $region32
        $region31: #{tpu_custom_call.1} parent=27 // pred_region
          %193 = dma.done %s186, 128
        $region32: #{tpu_custom_call.1} parent=27 // pred_fallthru
          _
        %s194 = sand.u32 %s76, 1
        %s195 = scalar_lea.sflag [#allocation6], %s194
        %s196 = sand.u32 %s76, 1
        %s197 = smul.addr %s196, 8
        %s198 = scalar_lea.vmem [#allocation5], %s197
        // Predicated region
        $region33: #{tpu_custom_call.1} parent=27 // pred_check
          %p199 = pneg %p89
        $region34: #{tpu_custom_call.1} parent=27 // pred_check_branch
          %201 = sbr.rel (%p199) target = $region36
        $region35: #{tpu_custom_call.1} parent=27 // pred_region
          %202 = dma.done %s195, 128
        $region36: #{tpu_custom_call.1} parent=27 // pred_fallthru
          _
        %s203 = sand.u32 %s46, 1
        %s204 = scalar_lea.sflag [#allocation3], %s203
        %s205 = sand.u32 %s46, 1
        %s206 = smul.addr %s205, 8
        %s207 = scalar_lea.vmem [#allocation2], %s206
        %p208 = pneg %p59
        %p209 = pneg %p56
        %s210 = sand.u32 %s76, 1
        %s211 = scalar_lea.sflag [#allocation6], %s210
        %s212 = sand.u32 %s76, 1
        %s213 = smul.addr %s212, 8
        %s214 = scalar_lea.vmem [#allocation5], %s213
        %p215 = pneg %p89
        %p216 = pneg %p86
        %p217 = pneg %p117
        %p218 = pneg %p114
        %s219 = sand.u32 %s104, 1
        %s220 = scalar_lea.sflag [#allocation4], %s219
        %s221 = sand.u32 %s104, 1
        %s222 = smul.addr %s221, 8
        %s223 = scalar_lea.vmem [#allocation7], %s222
        %s224 = sadd.s32 %s27, 1
        %s225 = sadd.s32 %s27, 1
        %v226 = vld [vmem:[%s189] sm:$0xff]
        %v227 = vld [vmem:[%s198] sm:$0xff]
        %v228 = vmax.f32 %v226, 0.0
        %v229 = vmul.f32 %v226, %v227
        %v230 = vsub.f32 %v228, %v229
        %v231 = vand.u32 2147483647, %v226
        %v232 = vsub.f32 0.0, %v231
        %v233 = vmul.f32 %v232, 1.442695
        %v234 = vpow.pop %v233
        %v235 = vadd.f32 %v234, 1.0
        %v236 = vlog2.pop %v235
        %v237 = vmul.f32 %v236, 0.6931472
        %v238 = vmul.f32 -0.5, %v234
        %v239 = vadd.f32 %v238, 1.0
        %v240 = vmul.f32 %v239, %v234
        %v241 = vand.u32 2147483647, %v234
        %vm242 = vcmp.lt.f32.partialorder %v241, 0.0004427343
        %v243 = vsel %vm242, %v240, %v237
        %v244 = vadd.f32 %v230, %v243
        %v245 = vadd.f32 %v244, 0.0
        %246 = vst [vmem:[%s223] sm:$0xff] %v245
        %s247 = sand.u32 %s104, 1
        %s248 = scalar_lea.sflag [#allocation4], %s247
        %s249 = sand.u32 %s104, 1
        %s250 = smul.addr %s249, 8
        %s251 = scalar_lea.vmem [#allocation7], %s250
        // Predicated region
        $region37: #{tpu_custom_call.1} parent=27 // pred_check
          %p252 = pneg %p114
        $region38: #{tpu_custom_call.1} parent=27 // pred_check_branch
          %254 = sbr.rel (%p252) target = $region40
        $region39: #{tpu_custom_call.1} parent=27 // pred_region
          %s256 = ssub.s32 128, 128
          %257 = vsyncadd %s248, %s256
          %s258 = smul.addr %s26, 3
          %s259 = sadd.s32 %s27, %s258
          %s260 = smul.addr %s259, 128
          %s261 = scalar_lea.hbm %s2, %s260
          %s263 = sshll.u32 %s251, 4
          %s264 = int_to_ptr.vmem [resolvable:$true] %s263
          %266 = dma.vmem_to_hbm [thread:$0]  %s264, 128, %s261, %s248
        $region40: #{tpu_custom_call.1} parent=27 // pred_fallthru
          _
      $region28: #{tpu_custom_call.1} parent=5 // pred_fallthru
        _
      %p267 = scmp.le.s32.totalorder 2, %s17
      // Predicated region
      $region41: #{tpu_custom_call.1} parent=5 // pred_check
        %p268 = pneg %p267
      $region42: #{tpu_custom_call.1} parent=5 // pred_check_branch
        %270 = sbr.rel (%p268) target = $region44
      $region43: #{tpu_custom_call.1} parent=5 // pred_region
        %s271 = ssub.s32 %s17, 2
        // Predicated region
        $region45: #{tpu_custom_call.1} parent=43 // pred_check
          %p272 = pneg %p120
        $region46: #{tpu_custom_call.1} parent=43 // pred_check_branch
          %274 = sbr.rel (%p272) target = $region48
        $region47: #{tpu_custom_call.1} parent=43 // pred_region
          %s275 = sand.u32 %s105, 1
          %s276 = scalar_lea.sflag [#allocation4], %s275
          %s277 = sand.u32 %s105, 1
          %s278 = smul.addr %s277, 8
          %s279 = scalar_lea.vmem [#allocation7], %s278
          %280 = dma.done %s276, 128
        $region48: #{tpu_custom_call.1} parent=43 // pred_fallthru
          _
      $region44: #{tpu_custom_call.1} parent=5 // pred_fallthru
        _
    $region6: #{tpu_custom_call.1} parent=1 // loop_footer
      %s21 = sadd.s32 1, %s17
    $region7: #{tpu_custom_call.1} parent=1 // loop_footer_branch
      %16 = sbr.rel target = $region3
    $region8: #{tpu_custom_call.1} parent=1 // loop_exit
      _
    %281 = vsyncpa [#allocation3], 1
    %s282 = scalar_lea.sflag [#allocation3], 1
    %283 = vsyncpa %s282, 1
    %284 = vsyncpa [#allocation6], 1
    %s285 = scalar_lea.sflag [#allocation6], 1
    %286 = vsyncpa %s285, 1
    %287 = vsyncpa [#allocation4], 1
    %s288 = scalar_lea.sflag [#allocation4], 1
    %289 = vsyncpa %s288, 1

</llo_original>
